<compile_context>
chip_gen: v6e
topology: v6e:2x2x1
jax: 0.10.0
libtpu: 0.0.40
codegen_flags: <defaults>
</compile_context>

<pallas_src>
import jax
import jax.numpy as jnp
from jax.experimental import pallas as pl
from jax.experimental.pallas import tpu as pltpu

_HID = 7  # hidden width of Linear(2, 7)


def _mlp_kernel(params_ref, xt_ref, o_ref):
    # params_ref: SMEM f32[29]   layout: w1 (2*7 row-major, (in, out)),
    #                                    b1 (7), w2 (7), b2 (1)
    # xt_ref:     VMEM f32[2, TR, 128]  (features, batch-rows, batch-lanes)
    # o_ref:      VMEM f32[TR, 128]
    x0 = xt_ref[0]  # (TR, 128)
    x1 = xt_ref[1]  # (TR, 128)

    # y = b2 + sum_j relu(x0*w1[0,j] + x1*w1[1,j] + b1[j]) * w2[j]
    y = jnp.full(x0.shape, params_ref[3 * _HID + _HID], dtype=jnp.float32)
    for j in range(_HID):
        h = (x0 * params_ref[j]
             + x1 * params_ref[_HID + j]
             + params_ref[2 * _HID + j])
        h = jnp.maximum(h, 0.0)
        y = y + h * params_ref[3 * _HID + j]

    o_ref[...] = jax.nn.sigmoid(y)  # exp -> EUP slot


def net_forward(x, w1, b1, w2, b2, *, max_rows_per_tile=4096):
    """x: (B, 2) f32 -> (B, 1) f32, matching Net.forward semantics.

    w1: (2, 7) (in, out) layout; b1: (7,) or (1, 7); w2: (7, 1) or (7,);
    b2: scalar / (1,) / (1, 1).
    """
    B = x.shape[0]

    # Flatten all 29 parameters into one SMEM-resident f32 vector.
    params = jnp.concatenate([
        jnp.asarray(w1, jnp.float32).reshape(-1),   # 14  (w1[0,:], w1[1,:])
        jnp.asarray(b1, jnp.float32).reshape(-1),   # 7
        jnp.asarray(w2, jnp.float32).reshape(-1),   # 7
        jnp.asarray(b2, jnp.float32).reshape(-1),   # 1
    ])

    # Sublane+lane dense layout: batch -> (rows, 128 lanes).
    rows = (B + 127) // 128                                   # cdiv(B, 128)
    n_tiles = (rows + max_rows_per_tile - 1) // max_rows_per_tile
    tr = (((rows + n_tiles - 1) // n_tiles) + 7) // 8 * 8      # balanced, mult of 8
    rows_pad = n_tiles * tr
    b_pad = rows_pad * 128

    # Single transpose+pad (fuses in XLA), then a free contiguous reshape.
    xt = jnp.pad(jnp.asarray(x, jnp.float32).T, ((0, 0), (0, b_pad - B)))
    xt = xt.reshape(2, rows_pad, 128)

    out = pl.pallas_call(
        _mlp_kernel,
        out_shape=jax.ShapeDtypeStruct((rows_pad, 128), jnp.float32),
        grid=(n_tiles,),
        in_specs=[
            pl.BlockSpec(memory_space=pltpu.MemorySpace.SMEM),   # params -> SMEM
            pl.BlockSpec((2, tr, 128), lambda i: (0, i, 0)),     # x tile
        ],
        out_specs=pl.BlockSpec((tr, 128), lambda i: (i, 0)),
        compiler_params=pltpu.CompilerParams(
            dimension_semantics=("parallel",)),
    )(params, xt)

    # Un-pad: contiguous reshape + slice, no transpose needed.
    return out.reshape(-1)[:B].reshape(B, 1)


def init_params(key):
    """Deterministic parameter init mirroring nn.Linear shapes.

    PyTorch stores Linear weight as (out, in); we store the transpose (in, out)
    so the forward pass computes x @ W + b.
    """
    k1, k2, k3, k4 = jax.random.split(key, 4)
    # Linear(2, 7)
    bound1 = 1.0 / jnp.sqrt(2.0)
    w1 = jax.random.uniform(k1, (2, 7), jnp.float32, -bound1, bound1)
    b1 = jax.random.uniform(k2, (1, 7), jnp.float32, -bound1, bound1)
    # Linear(7, 1)
    bound2 = 1.0 / jnp.sqrt(7.0)
    w2 = jax.random.uniform(k3, (7, 1), jnp.float32, -bound2, bound2)
    b2 = jax.random.uniform(k4, (1, 1), jnp.float32, -bound2, bound2)
    return w1, b1, w2, b2


if __name__ == "__main__":
    key = jax.random.PRNGKey(0)
    kx, kx2, kp = jax.random.split(key, 3)

    w1, b1, w2, b2 = init_params(kp)

    def _ref(xv):
        return jax.nn.sigmoid(jnp.maximum(xv @ w1 + b1, 0.0) @ w2 + b2)

    # Small batch (single tile, heavy padding path).
    batch = 8
    x = jax.random.normal(kx, (batch, 2), jnp.float32)
    out = jax.block_until_ready(net_forward(x, w1, b1, w2, b2))
    assert out.shape == (batch, 1)
    assert jnp.allclose(out, _ref(x), atol=1e-5, rtol=1e-5), "mismatch (B=8)"

    # Ragged batch (not a multiple of 128) to exercise the padding/unpad path.
    batch2 = 200
    x2 = jax.random.normal(kx2, (batch2, 2), jnp.float32)
    out2 = jax.block_until_ready(net_forward(x2, w1, b1, w2, b2))
    assert out2.shape == (batch2, 1)
    assert jnp.allclose(out2, _ref(x2), atol=1e-5, rtol=1e-5), "mismatch (B=200)"

    print("KERNEL_OK")
</pallas_src>

<mosaic_0001>
module attributes {stable_mosaic.version = 11 : i64} {
  func.func @_mlp_kernel(%arg0: i32, %arg1: memref<29xf32, #tpu.memory_space<smem>>, %arg2: memref<2x8x128xf32, #tpu.memory_space<vmem>>, %arg3: memref<8x128xf32, #tpu.memory_space<vmem>>) attributes {dimension_semantics = [#tpu.dimension_semantics<parallel>], iteration_bounds = array<i64: 1>, scalar_prefetch = 0 : i64, scratch_operands = 0 : i64, tpu.core_type = #tpu.core_type<tc>, window_params = [{transform_indices = @transform_0, window_bounds = array<i64: 29>}, {transform_indices = @transform_1, window_bounds = array<i64: 2, 8, 128>}, {transform_indices = @transform_2, window_bounds = array<i64: 8, 128>}]} {
    %c0 = arith.constant 0 : index
    %c0_0 = arith.constant 0 : index
    %c0_1 = arith.constant 0 : index
    %0 = vector.load %arg2[%c0, %c0_0, %c0_1] : memref<2x8x128xf32, #tpu.memory_space<vmem>>, vector<1x8x128xf32>
    %1 = vector.shape_cast %0 : vector<1x8x128xf32> to vector<8x128xf32>
    %c1 = arith.constant 1 : index
    %c0_2 = arith.constant 0 : index
    %c0_3 = arith.constant 0 : index
    %2 = vector.load %arg2[%c1, %c0_2, %c0_3] : memref<2x8x128xf32, #tpu.memory_space<vmem>>, vector<1x8x128xf32>
    %3 = vector.shape_cast %2 : vector<1x8x128xf32> to vector<8x128xf32>
    %c28 = arith.constant 28 : index
    %4 = memref.load %arg1[%c28] : memref<29xf32, #tpu.memory_space<smem>>
    %5 = vector.broadcast %4 : f32 to vector<8x128xf32>
    %c0_4 = arith.constant 0 : index
    %6 = memref.load %arg1[%c0_4] : memref<29xf32, #tpu.memory_space<smem>>
    %7 = vector.broadcast %6 : f32 to vector<8x128xf32>
    %8 = arith.mulf %1, %7 : vector<8x128xf32>
    %c7 = arith.constant 7 : index
    %9 = memref.load %arg1[%c7] : memref<29xf32, #tpu.memory_space<smem>>
    %10 = vector.broadcast %9 : f32 to vector<8x128xf32>
    %11 = arith.mulf %3, %10 : vector<8x128xf32>
    %12 = arith.addf %8, %11 : vector<8x128xf32>
    %c14 = arith.constant 14 : index
    %13 = memref.load %arg1[%c14] : memref<29xf32, #tpu.memory_space<smem>>
    %14 = vector.broadcast %13 : f32 to vector<8x128xf32>
    %15 = arith.addf %12, %14 : vector<8x128xf32>
    %cst = arith.constant 0.000000e+00 : f32
    %16 = vector.broadcast %cst : f32 to vector<8x128xf32>
    %17 = arith.maximumf %15, %16 : vector<8x128xf32>
    %c21 = arith.constant 21 : index
    %18 = memref.load %arg1[%c21] : memref<29xf32, #tpu.memory_space<smem>>
    %19 = vector.broadcast %18 : f32 to vector<8x128xf32>
    %20 = arith.mulf %17, %19 : vector<8x128xf32>
    %21 = arith.addf %5, %20 : vector<8x128xf32>
    %c1_5 = arith.constant 1 : index
    %22 = memref.load %arg1[%c1_5] : memref<29xf32, #tpu.memory_space<smem>>
    %23 = vector.broadcast %22 : f32 to vector<8x128xf32>
    %24 = arith.mulf %1, %23 : vector<8x128xf32>
    %c8 = arith.constant 8 : index
    %25 = memref.load %arg1[%c8] : memref<29xf32, #tpu.memory_space<smem>>
    %26 = vector.broadcast %25 : f32 to vector<8x128xf32>
    %27 = arith.mulf %3, %26 : vector<8x128xf32>
    %28 = arith.addf %24, %27 : vector<8x128xf32>
    %c15 = arith.constant 15 : index
    %29 = memref.load %arg1[%c15] : memref<29xf32, #tpu.memory_space<smem>>
    %30 = vector.broadcast %29 : f32 to vector<8x128xf32>
    %31 = arith.addf %28, %30 : vector<8x128xf32>
    %cst_6 = arith.constant 0.000000e+00 : f32
    %32 = vector.broadcast %cst_6 : f32 to vector<8x128xf32>
    %33 = arith.maximumf %31, %32 : vector<8x128xf32>
    %c22 = arith.constant 22 : index
    %34 = memref.load %arg1[%c22] : memref<29xf32, #tpu.memory_space<smem>>
    %35 = vector.broadcast %34 : f32 to vector<8x128xf32>
    %36 = arith.mulf %33, %35 : vector<8x128xf32>
    %37 = arith.addf %21, %36 : vector<8x128xf32>
    %c2 = arith.constant 2 : index
    %38 = memref.load %arg1[%c2] : memref<29xf32, #tpu.memory_space<smem>>
    %39 = vector.broadcast %38 : f32 to vector<8x128xf32>
    %40 = arith.mulf %1, %39 : vector<8x128xf32>
    %c9 = arith.constant 9 : index
    %41 = memref.load %arg1[%c9] : memref<29xf32, #tpu.memory_space<smem>>
    %42 = vector.broadcast %41 : f32 to vector<8x128xf32>
    %43 = arith.mulf %3, %42 : vector<8x128xf32>
    %44 = arith.addf %40, %43 : vector<8x128xf32>
    %c16 = arith.constant 16 : index
    %45 = memref.load %arg1[%c16] : memref<29xf32, #tpu.memory_space<smem>>
    %46 = vector.broadcast %45 : f32 to vector<8x128xf32>
    %47 = arith.addf %44, %46 : vector<8x128xf32>
    %cst_7 = arith.constant 0.000000e+00 : f32
    %48 = vector.broadcast %cst_7 : f32 to vector<8x128xf32>
    %49 = arith.maximumf %47, %48 : vector<8x128xf32>
    %c23 = arith.constant 23 : index
    %50 = memref.load %arg1[%c23] : memref<29xf32, #tpu.memory_space<smem>>
    %51 = vector.broadcast %50 : f32 to vector<8x128xf32>
    %52 = arith.mulf %49, %51 : vector<8x128xf32>
    %53 = arith.addf %37, %52 : vector<8x128xf32>
    %c3 = arith.constant 3 : index
    %54 = memref.load %arg1[%c3] : memref<29xf32, #tpu.memory_space<smem>>
    %55 = vector.broadcast %54 : f32 to vector<8x128xf32>
    %56 = arith.mulf %1, %55 : vector<8x128xf32>
    %c10 = arith.constant 10 : index
    %57 = memref.load %arg1[%c10] : memref<29xf32, #tpu.memory_space<smem>>
    %58 = vector.broadcast %57 : f32 to vector<8x128xf32>
    %59 = arith.mulf %3, %58 : vector<8x128xf32>
    %60 = arith.addf %56, %59 : vector<8x128xf32>
    %c17 = arith.constant 17 : index
    %61 = memref.load %arg1[%c17] : memref<29xf32, #tpu.memory_space<smem>>
    %62 = vector.broadcast %61 : f32 to vector<8x128xf32>
    %63 = arith.addf %60, %62 : vector<8x128xf32>
    %cst_8 = arith.constant 0.000000e+00 : f32
    %64 = vector.broadcast %cst_8 : f32 to vector<8x128xf32>
    %65 = arith.maximumf %63, %64 : vector<8x128xf32>
    %c24 = arith.constant 24 : index
    %66 = memref.load %arg1[%c24] : memref<29xf32, #tpu.memory_space<smem>>
    %67 = vector.broadcast %66 : f32 to vector<8x128xf32>
    %68 = arith.mulf %65, %67 : vector<8x128xf32>
    %69 = arith.addf %53, %68 : vector<8x128xf32>
    %c4 = arith.constant 4 : index
    %70 = memref.load %arg1[%c4] : memref<29xf32, #tpu.memory_space<smem>>
    %71 = vector.broadcast %70 : f32 to vector<8x128xf32>
    %72 = arith.mulf %1, %71 : vector<8x128xf32>
    %c11 = arith.constant 11 : index
    %73 = memref.load %arg1[%c11] : memref<29xf32, #tpu.memory_space<smem>>
    %74 = vector.broadcast %73 : f32 to vector<8x128xf32>
    %75 = arith.mulf %3, %74 : vector<8x128xf32>
    %76 = arith.addf %72, %75 : vector<8x128xf32>
    %c18 = arith.constant 18 : index
    %77 = memref.load %arg1[%c18] : memref<29xf32, #tpu.memory_space<smem>>
    %78 = vector.broadcast %77 : f32 to vector<8x128xf32>
    %79 = arith.addf %76, %78 : vector<8x128xf32>
    %cst_9 = arith.constant 0.000000e+00 : f32
    %80 = vector.broadcast %cst_9 : f32 to vector<8x128xf32>
    %81 = arith.maximumf %79, %80 : vector<8x128xf32>
    %c25 = arith.constant 25 : index
    %82 = memref.load %arg1[%c25] : memref<29xf32, #tpu.memory_space<smem>>
    %83 = vector.broadcast %82 : f32 to vector<8x128xf32>
    %84 = arith.mulf %81, %83 : vector<8x128xf32>
    %85 = arith.addf %69, %84 : vector<8x128xf32>
    %c5 = arith.constant 5 : index
    %86 = memref.load %arg1[%c5] : memref<29xf32, #tpu.memory_space<smem>>
    %87 = vector.broadcast %86 : f32 to vector<8x128xf32>
    %88 = arith.mulf %1, %87 : vector<8x128xf32>
    %c12 = arith.constant 12 : index
    %89 = memref.load %arg1[%c12] : memref<29xf32, #tpu.memory_space<smem>>
    %90 = vector.broadcast %89 : f32 to vector<8x128xf32>
    %91 = arith.mulf %3, %90 : vector<8x128xf32>
    %92 = arith.addf %88, %91 : vector<8x128xf32>
    %c19 = arith.constant 19 : index
    %93 = memref.load %arg1[%c19] : memref<29xf32, #tpu.memory_space<smem>>
    %94 = vector.broadcast %93 : f32 to vector<8x128xf32>
    %95 = arith.addf %92, %94 : vector<8x128xf32>
    %cst_10 = arith.constant 0.000000e+00 : f32
    %96 = vector.broadcast %cst_10 : f32 to vector<8x128xf32>
    %97 = arith.maximumf %95, %96 : vector<8x128xf32>
    %c26 = arith.constant 26 : index
    %98 = memref.load %arg1[%c26] : memref<29xf32, #tpu.memory_space<smem>>
    %99 = vector.broadcast %98 : f32 to vector<8x128xf32>
    %100 = arith.mulf %97, %99 : vector<8x128xf32>
    %101 = arith.addf %85, %100 : vector<8x128xf32>
    %c6 = arith.constant 6 : index
    %102 = memref.load %arg1[%c6] : memref<29xf32, #tpu.memory_space<smem>>
    %103 = vector.broadcast %102 : f32 to vector<8x128xf32>
    %104 = arith.mulf %1, %103 : vector<8x128xf32>
    %c13 = arith.constant 13 : index
    %105 = memref.load %arg1[%c13] : memref<29xf32, #tpu.memory_space<smem>>
    %106 = vector.broadcast %105 : f32 to vector<8x128xf32>
    %107 = arith.mulf %3, %106 : vector<8x128xf32>
    %108 = arith.addf %104, %107 : vector<8x128xf32>
    %c20 = arith.constant 20 : index
    %109 = memref.load %arg1[%c20] : memref<29xf32, #tpu.memory_space<smem>>
    %110 = vector.broadcast %109 : f32 to vector<8x128xf32>
    %111 = arith.addf %108, %110 : vector<8x128xf32>
    %cst_11 = arith.constant 0.000000e+00 : f32
    %112 = vector.broadcast %cst_11 : f32 to vector<8x128xf32>
    %113 = arith.maximumf %111, %112 : vector<8x128xf32>
    %c27 = arith.constant 27 : index
    %114 = memref.load %arg1[%c27] : memref<29xf32, #tpu.memory_space<smem>>
    %115 = vector.broadcast %114 : f32 to vector<8x128xf32>
    %116 = arith.mulf %113, %115 : vector<8x128xf32>
    %117 = arith.addf %101, %116 : vector<8x128xf32>
    %118 = arith.negf %117 : vector<8x128xf32>
    %119 = math.exp %118 : vector<8x128xf32>
    %cst_12 = arith.constant 1.000000e+00 : f32
    %120 = vector.broadcast %cst_12 : f32 to vector<8x128xf32>
    %121 = arith.addf %120, %119 : vector<8x128xf32>
    %122 = arith.divf %120, %121 : vector<8x128xf32>
    %c0_13 = arith.constant 0 : index
    %c0_14 = arith.constant 0 : index
    %123 = vector.load %arg3[%c0_13, %c0_14] : memref<8x128xf32, #tpu.memory_space<vmem>>, vector<8x128xf32>
    tpu.vector_store %arg3[%c0_13, %c0_14], %122 {strides = array<i32>} : memref<8x128xf32, #tpu.memory_space<vmem>>, vector<8x128xf32>,
    return
  }
  func.func @transform_0(%arg0: i32) -> i32 {
    %c0_i32 = arith.constant 0 : i32
    %c0_i32_0 = arith.constant 0 : i32
    return %c0_i32 : i32
  }
  func.func @transform_1(%arg0: i32) -> (i32, i32, i32) {
    %c0_i32 = arith.constant 0 : i32
    %c0_i32_0 = arith.constant 0 : i32
    %c0_i32_1 = arith.constant 0 : i32
    return %c0_i32, %arg0, %c0_i32_0 : i32, i32, i32
  }
  func.func @transform_2(%arg0: i32) -> (i32, i32) {
    %c0_i32 = arith.constant 0 : i32
    %c0_i32_0 = arith.constant 0 : i32
    return %arg0, %c0_i32 : i32, i32
  }
}

</mosaic_0001>

<llo_original>
// kernel: tpu_custom_call.1
$region0: #{tpu_custom_call.1}
  #allocation0 [shape = 'u32[]', space=smem, size = 0x4, offset = 0x4, fixed_abs, tag = 'smem constant byte address 0x4 - core index']
  #allocation1 [shape = 'u32[144,128]{1,0:T(1,128)}', space=vmem, size = 0x12000, scoped, tag = 'internal scratch']
  %s0 = inlined_call_operand.hbm [shape: f32[29], index: 0, kind: input, shape index: {}]
  %s1 = inlined_call_operand.hbm [shape: f32[2,8,128], index: 1, kind: input, shape index: {}]
  %s2 = inlined_call_operand.hbm [shape: f32[8,128], index: 2, kind: output, shape index: {}]
  %s3 = sld [smem:[#allocation0]]
  $region26: #{tpu_custom_call.1} parent=0
    _
  %s5 = ssub.s32 1, %s3
  %s6 = scalar_select 0, %s5, %s3
  $region1: #{tpu_custom_call.1} parent=0
    #allocation2 [shape = 'u8[512]{0}', space=smem, size = 0x200, scoped, tag = 'input window, operand 0, single buffered']
    #allocation3 [shape = 's32[1]{0}', space=sflag, size = 0x4, scoped, tag = 'scoped memory for tpu_custom_call.1']
    #allocation4 [shape = 's32[1]{0}', space=sflag, size = 0x4, scoped, tag = 'scoped memory for tpu_custom_call.1']
    #allocation5 [shape = 's32[1]{0}', space=sflag, size = 0x4, scoped, tag = 'scoped memory for tpu_custom_call.1']
    #allocation6 [shape = 'u8[8192]{0}', space=vmem, size = 0x2000, scoped, tag = 'input window, operand 1, single buffered']
    #allocation7 [shape = 'u8[4096]{0}', space=vmem, size = 0x1000, scoped, tag = 'output window, operand 0, single buffered']
    %7 = vsyncpa [#allocation5], 0
    %8 = vsyncpa [#allocation3], 0
    %9 = vsyncpa [#allocation4], 0
    // Predicated region
    $region2: #{tpu_custom_call.1} parent=1 // pred_check
      _
    $region3: #{tpu_custom_call.1} parent=1 // pred_check_branch
      %11 = sbr.rel (0) target = $region5
    $region4: #{tpu_custom_call.1} parent=1 // pred_region
      %s13 = ssub.s32 16, 16
      %14 = vsyncadd [#allocation5], %s13
      %17 = dma.hbm_to_smem %s0, 16, [#allocation2], [#allocation5]
    $region5: #{tpu_custom_call.1} parent=1 // pred_fallthru
      _
    // Predicated region
    $region6: #{tpu_custom_call.1} parent=1 // pred_check
      _
    $region7: #{tpu_custom_call.1} parent=1 // pred_check_branch
      %19 = sbr.rel (0) target = $region9
    $region8: #{tpu_custom_call.1} parent=1 // pred_region
      %s21 = ssub.s32 256, 256
      %22 = vsyncadd [#allocation3], %s21
      %s23 = sshll.u32 [#allocation6], 4
      %s24 = int_to_ptr.vmem [resolvable:$true] %s23
      %29 = dma.hbm_to_vmem [thread:$0]  %s1, 256, %s24, [#allocation3], 128, 128, 8
    $region9: #{tpu_custom_call.1} parent=1 // pred_fallthru
      _
    // Predicated region
    $region10: #{tpu_custom_call.1} parent=1 // pred_check
      _
    $region11: #{tpu_custom_call.1} parent=1 // pred_check_branch
      %31 = sbr.rel (0) target = $region13
    $region12: #{tpu_custom_call.1} parent=1 // pred_region
      %32 = dma.done [#allocation5], 16
    $region13: #{tpu_custom_call.1} parent=1 // pred_fallthru
      _
    // Predicated region
    $region14: #{tpu_custom_call.1} parent=1 // pred_check
      _
    $region15: #{tpu_custom_call.1} parent=1 // pred_check_branch
      %34 = sbr.rel (0) target = $region17
    $region16: #{tpu_custom_call.1} parent=1 // pred_region
      %35 = dma.done [#allocation3], 256
    $region17: #{tpu_custom_call.1} parent=1 // pred_fallthru
      _
    %36 = sfence
    %v37 = vld [vmem:[#allocation6] sm:$0xff]
    %s38 = scalar_lea.vmem [#allocation6], 8
    %v39 = vld [vmem:[%s38] sm:$0xff]
    %s40 = sld [smem:[#allocation2 + $0x1c]]
    %v41 = vstv %s40
    %s42 = sld [smem:[#allocation2]]
    %v43 = vstv %s42
    %v44 = vmul.f32 %v37, %v43
    %s45 = sld [smem:[#allocation2 + $0x7]]
    %v46 = vstv %s45
    %v47 = vmul.f32 %v39, %v46
    %v48 = vadd.f32 %v44, %v47
    %s49 = sld [smem:[#allocation2 + $0xe]]
    %v50 = vstv %s49
    %v51 = vadd.f32 %v48, %v50
    %v52 = vmax.f32 %v51, 0.0
    %s53 = sld [smem:[#allocation2 + $0x15]]
    %v54 = vstv %s53
    %v55 = vmul.f32 %v52, %v54
    %v56 = vadd.f32 %v41, %v55
    %s57 = sld [smem:[#allocation2 + $0x1]]
    %v58 = vstv %s57
    %v59 = vmul.f32 %v37, %v58
    %s60 = sld [smem:[#allocation2 + $0x8]]
    %v61 = vstv %s60
    %v62 = vmul.f32 %v39, %v61
    %v63 = vadd.f32 %v59, %v62
    %s64 = sld [smem:[#allocation2 + $0xf]]
    %v65 = vstv %s64
    %v66 = vadd.f32 %v63, %v65
    %v67 = vmax.f32 %v66, 0.0
    %s68 = sld [smem:[#allocation2 + $0x16]]
    %v69 = vstv %s68
    %v70 = vmul.f32 %v67, %v69
    %v71 = vadd.f32 %v56, %v70
    %s72 = sld [smem:[#allocation2 + $0x2]]
    %v73 = vstv %s72
    %v74 = vmul.f32 %v37, %v73
    %s75 = sld [smem:[#allocation2 + $0x9]]
    %v76 = vstv %s75
    %v77 = vmul.f32 %v39, %v76
    %v78 = vadd.f32 %v74, %v77
    %s79 = sld [smem:[#allocation2 + $0x10]]
    %v80 = vstv %s79
    %v81 = vadd.f32 %v78, %v80
    %v82 = vmax.f32 %v81, 0.0
    %s83 = sld [smem:[#allocation2 + $0x17]]
    %v84 = vstv %s83
    %v85 = vmul.f32 %v82, %v84
    %v86 = vadd.f32 %v71, %v85
    %s87 = sld [smem:[#allocation2 + $0x3]]
    %v88 = vstv %s87
    %v89 = vmul.f32 %v37, %v88
    %s90 = sld [smem:[#allocation2 + $0xa]]
    %v91 = vstv %s90
    %v92 = vmul.f32 %v39, %v91
    %v93 = vadd.f32 %v89, %v92
    %s94 = sld [smem:[#allocation2 + $0x11]]
    %v95 = vstv %s94
    %v96 = vadd.f32 %v93, %v95
    %v97 = vmax.f32 %v96, 0.0
    %s98 = sld [smem:[#allocation2 + $0x18]]
    %v99 = vstv %s98
    %v100 = vmul.f32 %v97, %v99
    %v101 = vadd.f32 %v86, %v100
    %s102 = sld [smem:[#allocation2 + $0x4]]
    %v103 = vstv %s102
    %v104 = vmul.f32 %v37, %v103
    %s105 = sld [smem:[#allocation2 + $0xb]]
    %v106 = vstv %s105
    %v107 = vmul.f32 %v39, %v106
    %v108 = vadd.f32 %v104, %v107
    %s109 = sld [smem:[#allocation2 + $0x12]]
    %v110 = vstv %s109
    %v111 = vadd.f32 %v108, %v110
    %v112 = vmax.f32 %v111, 0.0
    %s113 = sld [smem:[#allocation2 + $0x19]]
    %v114 = vstv %s113
    %v115 = vmul.f32 %v112, %v114
    %v116 = vadd.f32 %v101, %v115
    %s117 = sld [smem:[#allocation2 + $0x5]]
    %v118 = vstv %s117
    %v119 = vmul.f32 %v37, %v118
    %s120 = sld [smem:[#allocation2 + $0xc]]
    %v121 = vstv %s120
    %v122 = vmul.f32 %v39, %v121
    %v123 = vadd.f32 %v119, %v122
    %s124 = sld [smem:[#allocation2 + $0x13]]
    %v125 = vstv %s124
    %v126 = vadd.f32 %v123, %v125
    %v127 = vmax.f32 %v126, 0.0
    %s128 = sld [smem:[#allocation2 + $0x1a]]
    %v129 = vstv %s128
    %v130 = vmul.f32 %v127, %v129
    %v131 = vadd.f32 %v116, %v130
    %s132 = sld [smem:[#allocation2 + $0x6]]
    %v133 = vstv %s132
    %v134 = vmul.f32 %v37, %v133
    %s135 = sld [smem:[#allocation2 + $0xd]]
    %v136 = vstv %s135
    %v137 = vmul.f32 %v39, %v136
    %v138 = vadd.f32 %v134, %v137
    %s139 = sld [smem:[#allocation2 + $0x14]]
    %v140 = vstv %s139
    %v141 = vadd.f32 %v138, %v140
    %v142 = vmax.f32 %v141, 0.0
    %s143 = sld [smem:[#allocation2 + $0x1b]]
    %v144 = vstv %s143
    %v145 = vmul.f32 %v142, %v144
    %v146 = vadd.f32 %v131, %v145
    %v147 = vxor.u32 %v146, 2147483648
    %v148 = vmul.f32 %v147, 1.442695
    %v149 = vpow.pop %v148
    %v150 = vadd.f32 %v149, 1.0
    %v151 = vrcp.pop %v150
    %v152 = vmul.f32 1.0, %v151
    %153 = vst [vmem:[#allocation7] sm:$0xff] %v152
    // Predicated region
    $region18: #{tpu_custom_call.1} parent=1 // pred_check
      _
    $region19: #{tpu_custom_call.1} parent=1 // pred_check_branch
      %155 = sbr.rel (0) target = $region21
    $region20: #{tpu_custom_call.1} parent=1 // pred_region
      %s157 = ssub.s32 128, 128
      %158 = vsyncadd [#allocation4], %s157
      %s160 = sshll.u32 [#allocation7], 4
      %s161 = int_to_ptr.vmem [resolvable:$true] %s160
      %163 = dma.vmem_to_hbm [thread:$0]  %s161, 128, %s2, [#allocation4]
    $region21: #{tpu_custom_call.1} parent=1 // pred_fallthru
      _
    // Predicated region
    $region22: #{tpu_custom_call.1} parent=1 // pred_check
      _
    $region23: #{tpu_custom_call.1} parent=1 // pred_check_branch
      %165 = sbr.rel (0) target = $region25
    $region24: #{tpu_custom_call.1} parent=1 // pred_region
      %166 = dma.done [#allocation4], 128
    $region25: #{tpu_custom_call.1} parent=1 // pred_fallthru
      _
    %167 = vsyncpa [#allocation3], 1
    %168 = vsyncpa [#allocation4], 1
    %169 = vsyncpa [#allocation5], 1

</llo_original>
